<compile_context>
chip_gen: v6e
topology: v6e:2x2x1
jax: 0.10.0
libtpu: 0.0.40
codegen_flags: <defaults>
</compile_context>

<pallas_src>
import math

import jax
import jax.numpy as jnp
from jax.experimental import pallas as pl
from jax.experimental.pallas import tpu as pltpu


_DEFAULT_MAX_SPATIAL_CHUNK = 2048   # lanes per spatial chunk (multiple of 128)
_MIN_SPATIAL_CHUNK = 512            # keep contiguous DMA runs >= 2 KiB


def _tpu_vmem_and_cores():
    """Best-effort (per-core VMEM bytes, TensorCores per chip) query."""
    vmem = 128 * 1024 * 1024
    cores = 1
    try:
        info = pltpu.get_tpu_info()
        for attr in ("vmem_capacity_bytes", "vmem_bytes"):
            v = getattr(info, attr, None)
            if v:
                vmem = int(v)
                break
        for attr in ("num_cores", "core_count", "num_tensorcores"):
            c = getattr(info, attr, None)
            if c:
                cores = int(c)
                break
    except Exception:
        pass
    # v7x-class parts (64 MiB VMEM per TC) have 2 TensorCores per chip.
    if cores == 1 and vmem <= 64 * 1024 * 1024:
        cores = 2
    return vmem, cores


def _sublane_tile(dtype):
    # 8 rows for 4-byte dtypes, 16 for bf16/f16, 32 for 1-byte dtypes.
    return max(8, 32 // jnp.dtype(dtype).itemsize)


def _choose_tiles(N, C, HW, dtype, batch_tile=None, spatial_chunk=None):
    """Pick (TN, THW, vmem_limit_bytes): images/block, spatial lanes/chunk."""
    itemsize = jnp.dtype(dtype).itemsize
    vmem_bytes, n_cores = _tpu_vmem_and_cores()

    # Generation-aware per-block budget (Pallas double-buffers the x block).
    if vmem_bytes <= 64 * 1024 * 1024:          # v7x-class: 64 MiB VMEM / TC
        block_budget = 10 * 1024 * 1024
        vmem_cap = 44 * 1024 * 1024
    else:                                       # v5e / v6e: 128 MiB physical
        block_budget = 12 * 1024 * 1024
        vmem_cap = 96 * 1024 * 1024

    # ---- spatial chunk (lane axis) -------------------------------------
    if spatial_chunk is not None:
        thw = int(spatial_chunk)
        if thw >= HW:
            thw = HW
        else:
            # Multiple of 128 (lowering requirement) with a >=512-lane floor
            # so the strided DMA stays streaming-bandwidth bound.
            thw = max(_MIN_SPATIAL_CHUNK, (thw // 128) * 128)
            if thw >= HW:
                thw = HW
    elif HW <= _DEFAULT_MAX_SPATIAL_CHUNK:
        thw = HW                                 # whole spatial extent, no mask
    else:
        # Prefer a 128-multiple divisor of HW so the tail mask is never needed.
        thw = None
        for cand in range(_DEFAULT_MAX_SPATIAL_CHUNK, _MIN_SPATIAL_CHUNK - 1, -128):
            if HW % cand == 0:
                thw = cand
                break
        if thw is None:
            thw = _DEFAULT_MAX_SPATIAL_CHUNK     # masked tail on the last chunk

    # ---- batch tile ------------------------------------------------------
    sub = _sublane_tile(dtype)
    if batch_tile is not None:
        tn = max(1, min(int(batch_tile), N))
    else:
        fit = max(1, block_budget // max(1, C * thw * itemsize))
        tn = min(N, fit)
        if n_cores > 1 and N >= 2 * sub:
            # Keep >= n_cores blocks on the "parallel" batch axis so both v7x
            # TensorCores get work; keep TN sublane-tile aligned.
            per_core = -(-N // n_cores)
            per_core = max(sub, (per_core // sub) * sub)
            tn = min(tn, per_core)
        # TODO(synk): when N is too small for >=2 batch tiles on v7x, split the
        # spatial axis into a leading parallel axis with a partial-sum epilogue.
        if tn < N and tn > sub:
            tn = (tn // sub) * sub               # sublane-tile aligned output block

    # ---- scoped-VMEM ceiling (double-buffered x block + out blocks + acc) --
    x_block = tn * C * thw * itemsize
    out_block = tn * C * itemsize
    acc_block = tn * C * 4
    resident = 2 * x_block + 2 * out_block + acc_block
    vmem_limit = min(vmem_cap, max(32 * 1024 * 1024, resident + (4 << 20)))
    return tn, thw, int(vmem_limit)


def _make_eca_kernel(C, HW, k, TN, THW, n_chunks):
    pad = k // 2
    inv_hw = 1.0 / float(HW)
    tail = HW - (n_chunks - 1) * THW     # valid lanes in the last spatial chunk
    needs_mask = tail != THW
    last = n_chunks - 1

    def _partial_sum(x):
        # f32 accumulation of a (TN, C, THW) chunk over the lane axis.
        return jnp.sum(x, axis=2, dtype=jnp.float32)

    def _finalize(w_ref, o_ref, acc_ref):
        pooled = acc_ref[...] * inv_hw               # (TN, C) global average pool
        # k-tap zero-padded 1-D conv along channels; k is tiny & static so it's
        # unrolled: lane rolls on the XLU, masks/FMAs on the VPU, sigmoid on the
        # EUP — all hidden under the HBM-bound DMA (no MXU).
        ch = jax.lax.broadcasted_iota(jnp.int32, (TN, C), 1)
        conv = jnp.zeros((TN, C), jnp.float32)
        for j in range(k):
            off = j - pad
            shifted = pooled if off == 0 else jnp.roll(pooled, shift=-off, axis=1)
            valid = (ch + off >= 0) & (ch + off < C)
            conv = conv + w_ref[j] * jnp.where(valid, shifted, 0.0)
        o_ref[...] = jax.nn.sigmoid(conv).astype(o_ref.dtype)

    def kernel(w_ref, x_ref, o_ref, acc_ref):
        c_idx = pl.program_id(1)                     # spatial-chunk (reduction) index

        @pl.when(c_idx == 0)
        def _init():
            acc_ref[...] = jnp.zeros_like(acc_ref)

        if needs_mask:
            # Hot path: every full chunk is one load + one f32 add per vreg.
            @pl.when(c_idx != last)
            def _full_chunk():
                acc_ref[...] += _partial_sum(x_ref[...])

            # Cold path: mask the ragged tail, then finalize (static branch).
            @pl.when(c_idx == last)
            def _tail_and_finalize():
                lane = jax.lax.broadcasted_iota(jnp.int32, (TN, C, THW), 2)
                x = jnp.where(lane < tail, x_ref[...], jnp.zeros((), x_ref.dtype))
                acc_ref[...] += _partial_sum(x)
                _finalize(w_ref, o_ref, acc_ref)
        else:
            acc_ref[...] += _partial_sum(x_ref[...])

            @pl.when(c_idx == last)
            def _final():
                _finalize(w_ref, o_ref, acc_ref)

    return kernel


def efficient_channel_attention(x, w, *, batch_tile=None, spatial_chunk=None):
    """ECA forward.  x: (N, C, H, W), w: (k,) or (1,1,k) conv taps -> (N, C, 1, 1)."""
    N, C, H, W = x.shape
    HW = H * W
    k = int(w.shape[-1])
    w = w.reshape(k).astype(jnp.float32)

    # Lane-dense layout: flatten H*W onto the 128-lane axis (free reshape).
    x_flat = x.reshape(N, C, HW)

    TN, THW, vmem_limit = _choose_tiles(N, C, HW, x.dtype, batch_tile, spatial_chunk)
    n_batch = pl.cdiv(N, TN)
    n_chunks = pl.cdiv(HW, THW)

    kernel = _make_eca_kernel(C, HW, k, TN, THW, n_chunks)

    itemsize = x.dtype.itemsize
    cost = pl.CostEstimate(
        flops=int(N * C * HW + 2 * k * N * C),
        transcendentals=int(N * C),
        bytes_accessed=int(N * C * HW * itemsize + N * C * itemsize + k * 4),
    )

    out = pl.pallas_call(
        kernel,
        out_shape=jax.ShapeDtypeStruct((N, C), x.dtype),
        grid=(n_batch, n_chunks),
        in_specs=[
            pl.BlockSpec(memory_space=pltpu.SMEM),                # conv taps (scalar path)
            pl.BlockSpec((TN, C, THW), lambda n, c: (n, 0, c)),   # lane-dense x chunk
        ],
        # Same output block across the reduction axis -> resident in VMEM.
        # When N % TN != 0 the padded rows of the last batch tile only feed
        # accumulator rows that Pallas masks on writeback, so results stay valid.
        out_specs=pl.BlockSpec((TN, C), lambda n, c: (n, 0)),
        scratch_shapes=[pltpu.VMEM((TN, C), jnp.float32)],        # pooling accumulator
        compiler_params=pltpu.CompilerParams(
            dimension_semantics=("parallel", "arbitrary"),
            vmem_limit_bytes=vmem_limit),
        cost_estimate=cost,
    )(w, x_flat)
    return out.reshape(N, C, 1, 1)


def _eca_kernel_size(c, b=1, gamma=2):
    t = int(abs((math.log(c, 2) + b) / gamma))
    return t if t % 2 else t + 1


def _reference(x, w):
    # Pure-JAX reference of the PyTorch forward.
    N, C, H, W = x.shape
    k = w.shape[-1]
    w = w.reshape(k)
    pad = k // 2
    pooled = jnp.mean(x.astype(jnp.float32), axis=(2, 3))     # (N, C)
    pooled_p = jnp.pad(pooled, ((0, 0), (pad, pad)))          # zero padding
    conv = jnp.zeros((N, C), jnp.float32)
    for j in range(k):
        conv = conv + w[j] * pooled_p[:, j:j + C]
    return jax.nn.sigmoid(conv).astype(x.dtype).reshape(N, C, 1, 1)


if __name__ == "__main__":
    key = jax.random.PRNGKey(0)
    kx, kw, kx2, kx3 = jax.random.split(key, 4)

    # Small shapes consistent with the module: C=16 -> k=3 (padding=1).
    N, C, H, W = 2, 16, 16, 16
    k = _eca_kernel_size(C)
    x = jax.random.normal(kx, (N, C, H, W), dtype=jnp.float32)
    # Conv1d(1, 1, k, bias=False) weight has shape (1, 1, k); flatten to (k,).
    w = jax.random.normal(kw, (1, 1, k), dtype=jnp.float32).reshape(k)

    ref = _reference(x, w)
    out = jax.block_until_ready(efficient_channel_attention(x, w))
    assert out.shape == (N, C, 1, 1)
    assert jnp.allclose(out, ref, atol=1e-5, rtol=1e-5), "mismatch (default tiling)"

    # Multi-chunk accumulation: HW=1024 split into two 512-lane chunks.
    x2 = jax.random.normal(kx2, (3, C, 32, 32), dtype=jnp.float32)
    ref2 = _reference(x2, w)
    out2 = jax.block_until_ready(
        efficient_channel_attention(x2, w, spatial_chunk=512))
    assert jnp.allclose(out2, ref2, atol=1e-5, rtol=1e-5), "mismatch (chunked)"

    # Ragged spatial extent (HW=576 = 512 + 64): exercises the masked tail chunk.
    x3 = jax.random.normal(kx3, (3, C, 24, 24), dtype=jnp.float32)
    ref3 = _reference(x3, w)
    out3 = jax.block_until_ready(
        efficient_channel_attention(x3, w, spatial_chunk=512))
    assert jnp.allclose(out3, ref3, atol=1e-5, rtol=1e-5), "mismatch (masked tail)"

    print("KERNEL_OK")
</pallas_src>

<mosaic_0001>
module attributes {stable_mosaic.version = 11 : i64} {
  func.func @kernel(%arg0: i32, %arg1: i32, %arg2: memref<3xf32, #tpu.memory_space<smem>>, %arg3: memref<2x16x256xf32, #tpu.memory_space<vmem>>, %arg4: memref<2x16xf32, #tpu.memory_space<vmem>>, %arg5: memref<2x16xf32, #tpu.memory_space<vmem>>) attributes {dimension_semantics = [#tpu.dimension_semantics<parallel>, #tpu.dimension_semantics<arbitrary>], iteration_bounds = array<i64: 1, 1>, scalar_prefetch = 0 : i64, scratch_operands = 1 : i64, tpu.core_type = #tpu.core_type<tc>, window_params = [{transform_indices = @transform_0, window_bounds = array<i64: 3>}, {transform_indices = @transform_1, window_bounds = array<i64: 2, 16, 256>}, {transform_indices = @transform_2, window_bounds = array<i64: 2, 16>}]} {
    %c0_i32 = arith.constant 0 : i32
    %0 = arith.cmpi eq, %arg1, %c0_i32 : i32
    %1 = arith.extui %0 : i1 to i32
    %c0_i32_0 = arith.constant 0 : i32
    %2 = arith.cmpi ne, %1, %c0_i32_0 : i32
    scf.if %2 {
      %cst_9 = arith.constant 0.000000e+00 : f32
      %11 = vector.broadcast %cst_9 : f32 to vector<2x16xf32>
      %c0_10 = arith.constant 0 : index
      %c0_11 = arith.constant 0 : index
      %12 = vector.load %arg5[%c0_10, %c0_11] : memref<2x16xf32, #tpu.memory_space<vmem>>, vector<2x16xf32>
      tpu.vector_store %arg5[%c0_10, %c0_11], %11 {strides = array<i32>} : memref<2x16xf32, #tpu.memory_space<vmem>>, vector<2x16xf32>,
    } else {
    }
    %c0 = arith.constant 0 : index
    %c0_1 = arith.constant 0 : index
    %3 = vector.load %arg5[%c0, %c0_1] : memref<2x16xf32, #tpu.memory_space<vmem>>, vector<2x16xf32>
    %c0_2 = arith.constant 0 : index
    %c0_3 = arith.constant 0 : index
    %c0_4 = arith.constant 0 : index
    %4 = vector.load %arg3[%c0_2, %c0_3, %c0_4] : memref<2x16x256xf32, #tpu.memory_space<vmem>>, vector<2x16x256xf32>
    %cst = arith.constant dense<0.000000e+00> : vector<2x16xf32>
    %5 = vector.multi_reduction <add>, %4, %cst [2] : vector<2x16x256xf32> to vector<2x16xf32>
    %6 = arith.addf %3, %5 : vector<2x16xf32>
    %c0_5 = arith.constant 0 : index
    %c0_6 = arith.constant 0 : index
    %7 = vector.load %arg5[%c0_5, %c0_6] : memref<2x16xf32, #tpu.memory_space<vmem>>, vector<2x16xf32>
    tpu.vector_store %arg5[%c0_5, %c0_6], %6 {strides = array<i32>} : memref<2x16xf32, #tpu.memory_space<vmem>>, vector<2x16xf32>,
    %c0_i32_7 = arith.constant 0 : i32
    %8 = arith.cmpi eq, %arg1, %c0_i32_7 : i32
    %9 = arith.extui %8 : i1 to i32
    %c0_i32_8 = arith.constant 0 : i32
    %10 = arith.cmpi ne, %9, %c0_i32_8 : i32
    scf.if %10 {
      %c0_9 = arith.constant 0 : index
      %c0_10 = arith.constant 0 : index
      %11 = vector.load %arg5[%c0_9, %c0_10] : memref<2x16xf32, #tpu.memory_space<vmem>>, vector<2x16xf32>
      %cst_11 = arith.constant 3.906250e-03 : f32
      %12 = vector.broadcast %cst_11 : f32 to vector<2x16xf32>
      %13 = arith.mulf %11, %12 : vector<2x16xf32>
      %14 = tpu.iota {dimensions = array<i32: 1>} : vector<2x16xi32>
      %cst_12 = arith.constant 0.000000e+00 : f32
      %15 = vector.broadcast %cst_12 : f32 to vector<2x16xf32>
      %16 = vector.extract_strided_slice %13 {offsets = [0, 15], sizes = [2, 1], strides = [1, 1]} : vector<2x16xf32> to vector<2x1xf32>
      %17 = vector.extract_strided_slice %13 {offsets = [0, 0], sizes = [2, 15], strides = [1, 1]} : vector<2x16xf32> to vector<2x15xf32>
      %18 = tpu.concatenate %16, %17 in 1 : vector<2x1xf32>, vector<2x15xf32> -> vector<2x16xf32>
      %c-1_i32 = arith.constant -1 : i32
      %19 = vector.broadcast %c-1_i32 : i32 to vector<2x16xi32>
      %20 = arith.addi %14, %19 : vector<2x16xi32>
      %c0_i32_13 = arith.constant 0 : i32
      %21 = vector.broadcast %c0_i32_13 : i32 to vector<2x16xi32>
      %22 = arith.cmpi sge, %20, %21 : vector<2x16xi32>
      %c-1_i32_14 = arith.constant -1 : i32
      %23 = vector.broadcast %c-1_i32_14 : i32 to vector<2x16xi32>
      %24 = arith.addi %14, %23 : vector<2x16xi32>
      %c16_i32 = arith.constant 16 : i32
      %25 = vector.broadcast %c16_i32 : i32 to vector<2x16xi32>
      %26 = arith.cmpi slt, %24, %25 : vector<2x16xi32>
      %27 = arith.andi %22, %26 : vector<2x16xi1>
      %c0_15 = arith.constant 0 : index
      %28 = memref.load %arg2[%c0_15] : memref<3xf32, #tpu.memory_space<smem>>
      %cst_16 = arith.constant 0.000000e+00 : f32
      %29 = vector.broadcast %cst_16 : f32 to vector<2x16xf32>
      %30 = arith.select %27, %18, %29 : vector<2x16xi1>, vector<2x16xf32>
      %31 = vector.broadcast %28 : f32 to vector<2x16xf32>
      %32 = arith.mulf %31, %30 : vector<2x16xf32>
      %33 = arith.addf %15, %32 : vector<2x16xf32>
      %c0_i32_17 = arith.constant 0 : i32
      %34 = vector.broadcast %c0_i32_17 : i32 to vector<2x16xi32>
      %35 = arith.addi %14, %34 : vector<2x16xi32>
      %c0_i32_18 = arith.constant 0 : i32
      %36 = vector.broadcast %c0_i32_18 : i32 to vector<2x16xi32>
      %37 = arith.cmpi sge, %35, %36 : vector<2x16xi32>
      %c0_i32_19 = arith.constant 0 : i32
      %38 = vector.broadcast %c0_i32_19 : i32 to vector<2x16xi32>
      %39 = arith.addi %14, %38 : vector<2x16xi32>
      %c16_i32_20 = arith.constant 16 : i32
      %40 = vector.broadcast %c16_i32_20 : i32 to vector<2x16xi32>
      %41 = arith.cmpi slt, %39, %40 : vector<2x16xi32>
      %42 = arith.andi %37, %41 : vector<2x16xi1>
      %c1 = arith.constant 1 : index
      %43 = memref.load %arg2[%c1] : memref<3xf32, #tpu.memory_space<smem>>
      %cst_21 = arith.constant 0.000000e+00 : f32
      %44 = vector.broadcast %cst_21 : f32 to vector<2x16xf32>
      %45 = arith.select %42, %13, %44 : vector<2x16xi1>, vector<2x16xf32>
      %46 = vector.broadcast %43 : f32 to vector<2x16xf32>
      %47 = arith.mulf %46, %45 : vector<2x16xf32>
      %48 = arith.addf %33, %47 : vector<2x16xf32>
      %49 = vector.extract_strided_slice %13 {offsets = [0, 1], sizes = [2, 15], strides = [1, 1]} : vector<2x16xf32> to vector<2x15xf32>
      %50 = vector.extract_strided_slice %13 {offsets = [0, 0], sizes = [2, 1], strides = [1, 1]} : vector<2x16xf32> to vector<2x1xf32>
      %51 = tpu.concatenate %49, %50 in 1 : vector<2x15xf32>, vector<2x1xf32> -> vector<2x16xf32>
      %c1_i32 = arith.constant 1 : i32
      %52 = vector.broadcast %c1_i32 : i32 to vector<2x16xi32>
      %53 = arith.addi %14, %52 : vector<2x16xi32>
      %c0_i32_22 = arith.constant 0 : i32
      %54 = vector.broadcast %c0_i32_22 : i32 to vector<2x16xi32>
      %55 = arith.cmpi sge, %53, %54 : vector<2x16xi32>
      %c1_i32_23 = arith.constant 1 : i32
      %56 = vector.broadcast %c1_i32_23 : i32 to vector<2x16xi32>
      %57 = arith.addi %14, %56 : vector<2x16xi32>
      %c16_i32_24 = arith.constant 16 : i32
      %58 = vector.broadcast %c16_i32_24 : i32 to vector<2x16xi32>
      %59 = arith.cmpi slt, %57, %58 : vector<2x16xi32>
      %60 = arith.andi %55, %59 : vector<2x16xi1>
      %c2 = arith.constant 2 : index
      %61 = memref.load %arg2[%c2] : memref<3xf32, #tpu.memory_space<smem>>
      %cst_25 = arith.constant 0.000000e+00 : f32
      %62 = vector.broadcast %cst_25 : f32 to vector<2x16xf32>
      %63 = arith.select %60, %51, %62 : vector<2x16xi1>, vector<2x16xf32>
      %64 = vector.broadcast %61 : f32 to vector<2x16xf32>
      %65 = arith.mulf %64, %63 : vector<2x16xf32>
      %66 = arith.addf %48, %65 : vector<2x16xf32>
      %67 = arith.negf %66 : vector<2x16xf32>
      %68 = math.exp %67 : vector<2x16xf32>
      %cst_26 = arith.constant 1.000000e+00 : f32
      %69 = vector.broadcast %cst_26 : f32 to vector<2x16xf32>
      %70 = arith.addf %69, %68 : vector<2x16xf32>
      %71 = arith.divf %69, %70 : vector<2x16xf32>
      %c0_27 = arith.constant 0 : index
      %c0_28 = arith.constant 0 : index
      %72 = vector.load %arg4[%c0_27, %c0_28] : memref<2x16xf32, #tpu.memory_space<vmem>>, vector<2x16xf32>
      tpu.vector_store %arg4[%c0_27, %c0_28], %71 {strides = array<i32>} : memref<2x16xf32, #tpu.memory_space<vmem>>, vector<2x16xf32>,
    } else {
    }
    return
  }
  func.func @transform_0(%arg0: i32, %arg1: i32) -> i32 {
    %c0_i32 = arith.constant 0 : i32
    %c0_i32_0 = arith.constant 0 : i32
    return %c0_i32 : i32
  }
  func.func @transform_1(%arg0: i32, %arg1: i32) -> (i32, i32, i32) {
    %c0_i32 = arith.constant 0 : i32
    %c0_i32_0 = arith.constant 0 : i32
    return %arg0, %c0_i32, %arg1 : i32, i32, i32
  }
  func.func @transform_2(%arg0: i32, %arg1: i32) -> (i32, i32) {
    %c0_i32 = arith.constant 0 : i32
    %c0_i32_0 = arith.constant 0 : i32
    return %arg0, %c0_i32 : i32, i32
  }
}

</mosaic_0001>

<llo_original>
// kernel: tpu_custom_call.1
$region0: #{tpu_custom_call.1}
  #allocation0 [shape = 'u32[]', space=smem, size = 0x4, offset = 0x4, fixed_abs, tag = 'smem constant byte address 0x4 - core index']
  #allocation1 [shape = 'u32[144,128]{1,0:T(1,128)}', space=vmem, size = 0x12000, scoped, tag = 'internal scratch']
  #allocation2 [shape = 'f32[2,16]{1,0:T(2,128)}', space=vmem, size = 0x400, scoped, tag = 'scratch operand']
  %s0 = inlined_call_operand.hbm [shape: f32[3], index: 0, kind: input, shape index: {}]
  %s1 = inlined_call_operand.hbm [shape: f32[2,16,256], index: 1, kind: input, shape index: {}]
  %s2 = inlined_call_operand.hbm [shape: f32[2,16], index: 2, kind: output, shape index: {}]
  %s3 = sld [smem:[#allocation0]]
  $region34: #{tpu_custom_call.1} parent=0
    _
  %s5 = ssub.s32 1, %s3
  %s6 = scalar_select 0, %s5, %s3
  $region1: #{tpu_custom_call.1} parent=0
    #allocation3 [shape = 'u8[512]{0}', space=smem, size = 0x200, scoped, tag = 'input window, operand 0, single buffered']
    #allocation4 [shape = 's32[1]{0}', space=sflag, size = 0x4, scoped, tag = 'scoped memory for tpu_custom_call.1']
    #allocation5 [shape = 's32[1]{0}', space=sflag, size = 0x4, scoped, tag = 'scoped memory for tpu_custom_call.1']
    #allocation6 [shape = 's32[1]{0}', space=sflag, size = 0x4, scoped, tag = 'scoped memory for tpu_custom_call.1']
    #allocation7 [shape = 'u8[32768]{0}', space=vmem, size = 0x8000, scoped, tag = 'input window, operand 1, single buffered']
    #allocation8 [shape = 'u8[1024]{0}', space=vmem, size = 0x400, scoped, tag = 'output window, operand 0, single buffered']
    %7 = vsyncpa [#allocation6], 0
    %8 = vsyncpa [#allocation4], 0
    %9 = vsyncpa [#allocation5], 0
    // Predicated region
    $region2: #{tpu_custom_call.1} parent=1 // pred_check
      _
    $region3: #{tpu_custom_call.1} parent=1 // pred_check_branch
      %11 = sbr.rel (0) target = $region5
    $region4: #{tpu_custom_call.1} parent=1 // pred_region
      %s13 = ssub.s32 16, 16
      %14 = vsyncadd [#allocation6], %s13
      %17 = dma.hbm_to_smem %s0, 16, [#allocation3], [#allocation6]
    $region5: #{tpu_custom_call.1} parent=1 // pred_fallthru
      _
    // Predicated region
    $region6: #{tpu_custom_call.1} parent=1 // pred_check
      _
    $region7: #{tpu_custom_call.1} parent=1 // pred_check_branch
      %19 = sbr.rel (0) target = $region9
    $region8: #{tpu_custom_call.1} parent=1 // pred_region
      %s21 = ssub.s32 1024, 1024
      %22 = vsyncadd [#allocation4], %s21
      %s23 = sshll.u32 [#allocation7], 4
      %s24 = int_to_ptr.vmem [resolvable:$true] %s23
      %29 = dma.hbm_to_vmem [thread:$0]  %s1, 1024, %s24, [#allocation4], 256, 256, 16
    $region9: #{tpu_custom_call.1} parent=1 // pred_fallthru
      _
    // Predicated region
    $region10: #{tpu_custom_call.1} parent=1 // pred_check
      _
    $region11: #{tpu_custom_call.1} parent=1 // pred_check_branch
      %31 = sbr.rel (0) target = $region13
    $region12: #{tpu_custom_call.1} parent=1 // pred_region
      %32 = dma.done [#allocation6], 16
    $region13: #{tpu_custom_call.1} parent=1 // pred_fallthru
      _
    // Predicated region
    $region14: #{tpu_custom_call.1} parent=1 // pred_check
      _
    $region15: #{tpu_custom_call.1} parent=1 // pred_check_branch
      %34 = sbr.rel (0) target = $region17
    $region16: #{tpu_custom_call.1} parent=1 // pred_region
      %35 = dma.done [#allocation4], 1024
    $region17: #{tpu_custom_call.1} parent=1 // pred_fallthru
      _
    %36 = sfence
    %p37 = scmp.eq.s32.totalorder 0, 0
    // Predicated region
    $region18: #{tpu_custom_call.1} parent=1 // pred_check
      %p38 = pneg %p37
    $region19: #{tpu_custom_call.1} parent=1 // pred_check_branch
      %40 = sbr.rel (%p38) target = $region21
    $region20: #{tpu_custom_call.1} parent=1 // pred_region
      %vm41 = vcmask 123904
      %42 = vst.msk [vmem:[#allocation2] sm:$0x3] %vm41, 0.0
    $region21: #{tpu_custom_call.1} parent=1 // pred_fallthru
      _
    %v43 = vld [vmem:[#allocation2] sm:$0x3]
    %v44 = vld [vmem:[#allocation7] sm:$0xff]
    %v45 = vld [vmem:[#allocation7 + $0x8] sm:$0xff]
    %v46 = vld [vmem:[#allocation7 + $0x10] sm:$0xff]
    %v47 = vld [vmem:[#allocation7 + $0x18] sm:$0xff]
    %v48 = vld [vmem:[#allocation7 + $0x20] sm:$0xff]
    %v49 = vld [vmem:[#allocation7 + $0x28] sm:$0xff]
    %v50 = vld [vmem:[#allocation7 + $0x30] sm:$0xff]
    %v51 = vld [vmem:[#allocation7 + $0x38] sm:$0xff]
    %v52 = vadd.f32 %v44, %v45
    %53 = vadd.xlane.f32.xlu0 %v52
    %v54 = vpop.xlane.xlu0 %53
    %v55 = vadd.f32 %v46, %v47
    %56 = vadd.xlane.f32.xlu0 %v55
    %v57 = vpop.xlane.xlu0 %56
    %v58 = vadd.f32 %v48, %v49
    %59 = vadd.xlane.f32.xlu0 %v58
    %v60 = vpop.xlane.xlu0 %59
    %v61 = vadd.f32 %v50, %v51
    %62 = vadd.xlane.f32.xlu0 %v61
    %v63 = vpop.xlane.xlu0 %62
    %v68 = vlaneseq
    %v69 = vand.u32 %v68, 127
    %v70 = vlaneseq
    %v71 = vshrl.u32 %v70, 7
    %v72 = vsub.s32 %v69, %v71
    %v73 = vrot.slane %v54, %v72
    %v74 = vadd.s32 %v69, 4294967288
    %v75 = vlaneseq
    %v76 = vshrl.u32 %v75, 7
    %v77 = vsub.s32 %v74, %v76
    %v78 = vrot.slane %v57, %v77
    %vm79 = vcmask 130112
    %v80 = vsel %vm79, %v78, %v73
    %v81 = vlaneseq
    %v82 = vshrl.u32 %v81, 7
    %v83 = vsub.s32 %v69, %v82
    %v84 = vrot.slane %v60, %v83
    %v85 = vlaneseq
    %v86 = vshrl.u32 %v85, 7
    %v87 = vsub.s32 %v74, %v86
    %v88 = vrot.slane %v63, %v87
    %v89 = vsel %vm79, %v88, %v84
    %vm90 = vcmask 1041409
    %v91 = vsel %vm90, %v89, %v80
    %v93 = vadd.f32 %v43, %v91
    %vm94 = vcmask 123904
    %95 = vst.msk [vmem:[#allocation2] sm:$0x3] %vm94, %v93
    // Predicated region
    $region22: #{tpu_custom_call.1} parent=1 // pred_check
      %p96 = pneg %p37
    $region23: #{tpu_custom_call.1} parent=1 // pred_check_branch
      %98 = sbr.rel (%p96) target = $region25
    $region24: #{tpu_custom_call.1} parent=1 // pred_region
      %v99 = vld [vmem:[#allocation2] sm:$0x3]
      %v100 = vmul.f32 %v99, 0.00390625
      %102 = vrot.lane.b32.xlu0 %v100, 113
      %v103 = vpop.permute.xlu0 %102
      %105 = vrot.lane.b32.xlu0 %v100, 1
      %v106 = vpop.permute.xlu0 %105
      %vm108 = vcmask 7168
      %v109 = vsel %vm108, %v103, %v106
      %v110 = vadd.s32 %v69, 4294967295
      %vm111 = vcmp.ge.s32.totalorder %v110, 0
      %vm112 = vcmp.lt.s32.totalorder %v110, 16
      %vm113 = vmand %vm111, %vm112
      %s114 = sld [smem:[#allocation3]]
      %v115 = vsel %vm113, %v109, 0.0
      %v116 = vstv %s114
      %v117 = vmul.f32 %v116, %v115
      %v118 = vadd.f32 %v117, 0.0
      %vm119 = vcmp.ge.s32.totalorder %v69, 0
      %vm120 = vcmp.lt.s32.totalorder %v69, 16
      %vm121 = vmand %vm119, %vm120
      %s122 = sld [smem:[#allocation3 + $0x1]]
      %v123 = vsel %vm121, %v100, 0.0
      %v124 = vstv %s122
      %v125 = vmul.f32 %v124, %v123
      %v126 = vadd.f32 %v118, %v125
      %127 = vrot.lane.b32.xlu0 %v100, 127
      %v128 = vpop.permute.xlu0 %127
      %130 = vrot.lane.b32.xlu0 %v100, 15
      %v131 = vpop.permute.xlu0 %130
      %vm133 = vcmask 121856
      %v134 = vsel %vm133, %v128, %v131
      %v135 = vadd.s32 %v69, 1
      %vm136 = vcmp.ge.s32.totalorder %v135, 0
      %vm137 = vcmp.lt.s32.totalorder %v135, 16
      %vm138 = vmand %vm136, %vm137
      %s139 = sld [smem:[#allocation3 + $0x2]]
      %v140 = vsel %vm138, %v134, 0.0
      %v141 = vstv %s139
      %v142 = vmul.f32 %v141, %v140
      %v143 = vadd.f32 %v126, %v142
      %v144 = vxor.u32 %v143, 2147483648
      %v145 = vmul.f32 %v144, 1.442695
      %v146 = vpow.pop %v145
      %v147 = vadd.f32 %v146, 1.0
      %v148 = vrcp.pop %v147
      %v149 = vmul.f32 1.0, %v148
      %150 = vst.msk [vmem:[#allocation8] sm:$0x3] %vm94, %v149
    $region25: #{tpu_custom_call.1} parent=1 // pred_fallthru
      _
    // Predicated region
    $region26: #{tpu_custom_call.1} parent=1 // pred_check
      _
    $region27: #{tpu_custom_call.1} parent=1 // pred_check_branch
      %152 = sbr.rel (0) target = $region29
    $region28: #{tpu_custom_call.1} parent=1 // pred_region
      %s154 = ssub.s32 32, 32
      %155 = vsyncadd [#allocation5], %s154
      %s157 = sshll.u32 [#allocation8], 4
      %s158 = int_to_ptr.vmem [resolvable:$true] %s157
      %160 = dma.vmem_to_hbm [thread:$0]  %s158, 32, %s2, [#allocation5]
    $region29: #{tpu_custom_call.1} parent=1 // pred_fallthru
      _
    // Predicated region
    $region30: #{tpu_custom_call.1} parent=1 // pred_check
      _
    $region31: #{tpu_custom_call.1} parent=1 // pred_check_branch
      %162 = sbr.rel (0) target = $region33
    $region32: #{tpu_custom_call.1} parent=1 // pred_region
      %163 = dma.done [#allocation5], 32
    $region33: #{tpu_custom_call.1} parent=1 // pred_fallthru
      _
    %164 = vsyncpa [#allocation4], 1
    %165 = vsyncpa [#allocation5], 1
    %166 = vsyncpa [#allocation6], 1

</llo_original>
